<compile_context>
chip_gen: v7x
topology: tpu7x:2x2x1
jax: 0.10.0
libtpu: 0.0.40
codegen_flags: <defaults>
</compile_context>

<pallas_src>
import functools

import jax
import jax.numpy as jnp
from jax.experimental import pallas as pl
from jax.experimental.pallas import tpu as pltpu


def _round_up(n, m):
    return ((n + m - 1) // m) * m


def _vmem_budget_bytes():
    """Returns (per-step tile budget, vmem_limit_bytes) per TPU generation."""
    try:
        kind = jax.devices()[0].device_kind.lower()
    except Exception:  # pragma: no cover - defensive
        kind = ""
    if "v5" in kind or "v6" in kind:            # 128 MiB physical VMEM
        return 80 * 1024 * 1024, 112 * 1024 * 1024
    # v7x (64 MiB per TC) and unknown / interpret backends: stay conservative.
    return 36 * 1024 * 1024, 48 * 1024 * 1024


def _select_tile_b(B, H, Cp, x_itemsize, out_itemsize, tile_b_req, budget_bytes):
    """Pick a batch tile: multiple of 8, <= budget, >=2 tiles when splittable."""
    TB = min(_round_up(max(int(tile_b_req), 8), 8), _round_up(B, 8))
    if B >= 16:
        # Keep at least 2 batch tiles so the "parallel" grid axis can shard
        # across both TensorCores on v7x (negligible cost on 1-TC v5e/v6e).
        TB = min(TB, max(8, _round_up((B + 1) // 2, 8)))

    def footprint(tb):
        resident = H * Cp * 2 + Cp * 4                      # bf16 W + f32 bias
        per_tile = (tb * H * x_itemsize                      # x tile
                    + tb * 4                                 # labels tile
                    + tb * Cp * out_itemsize                 # logits tile
                    + 8 * 128 * 4)                           # per-tile NLL sum
        return 2 * (resident + per_tile)                     # double buffering

    while TB > 8 and footprint(TB) > budget_bytes:
        TB = max(8, _round_up(TB // 2, 8))
    return TB


def _make_cls_kernel(num_classes, num_classes_padded, batch, batch_padded, tile_b):
    """Fused linear-head + cross-entropy kernel body."""
    neg_big = -1e30  # Python float literal (no captured jnp constant!)
    need_col_mask = num_classes_padded != num_classes
    need_row_mask = batch_padded != batch

    def kernel(x_ref, w_ref, b_ref, y_ref, logits_ref, nllp_ref):
        # x_ref:      (TB, H)     native dtype  (tile of the batch)
        # w_ref:      (H, Cp)     bf16          (resident across the grid)
        # b_ref:      (1, Cp)     f32           (resident across the grid)
        # y_ref:      (TB, 1)     i32
        # logits_ref: (TB, Cp)    x.dtype       output (lane-dense slab)
        # nllp_ref:   (1, 8, 128) f32           per-tile NLL partial sum
        x = x_ref[...].astype(jnp.bfloat16)      # cast folded into the kernel
        w = w_ref[...]
        b = b_ref[...]

        # MXU matmul, bf16 inputs, f32 accumulation, + bias broadcast.
        logits = jnp.dot(x, w, preferred_element_type=jnp.float32) + b
        logits_ref[...] = logits.astype(logits_ref.dtype)   # full-lane vst

        # Numerically-stable log-softmax over the *real* classes only.
        col = jax.lax.broadcasted_iota(jnp.int32, logits.shape, 1)     # (TB, Cp)
        if need_col_mask:
            z_src = jnp.where(col < num_classes, logits, neg_big)
        else:
            z_src = logits
        m = jnp.max(z_src, axis=-1, keepdims=True)                     # (TB, 1)
        z = z_src - m                                                  # (TB, Cp)
        lse = jnp.log(jnp.sum(jnp.exp(z), axis=-1, keepdims=True))     # (TB, 1)

        # NLL without a float one-hot:  nll = lse - z[y]
        y = y_ref[...]                                                 # (TB, 1)
        z_y = jnp.sum(jnp.where(col == y, z, 0.0), axis=-1, keepdims=True)
        nll = lse - z_y                                                # (TB, 1)

        if need_row_mask:
            row = (pl.program_id(0) * tile_b
                   + jax.lax.broadcasted_iota(jnp.int32, nll.shape, 0))
            nll = jnp.where(row < batch, nll, 0.0)

        # Per-tile partial sum, broadcast into a lane-dense (8,128) block.
        tile_sum = jnp.sum(nll)
        nllp_ref[...] = jnp.broadcast_to(tile_sum, nllp_ref.shape).astype(jnp.float32)

    return kernel


@functools.partial(jax.jit, static_argnames=("tile_b",))
def classification_forward(x, w, b, labels, *, tile_b=512):
    """Fused linear-head + cross-entropy forward on TPU via Pallas.

    Args:
      x:      (B, H) float  features
      w:      (H, C) float  classifier weight
      b:      (C,)   float  classifier bias
      labels: (B,)   int    class ids
    Returns:
      dict with 'logits' (B, C) in x.dtype and scalar 'loss' (mean CE, f32).
    """
    B, H = x.shape
    C = w.shape[1]
    Cp = _round_up(max(C, 1), 128)                 # lane-dense class dim

    budget, vmem_limit = _vmem_budget_bytes()
    out_dtype = x.dtype
    TB = _select_tile_b(B, H, Cp, jnp.dtype(x.dtype).itemsize,
                        jnp.dtype(out_dtype).itemsize, tile_b, budget)
    B_pad = _round_up(B, TB)
    nb = B_pad // TB

    # --- Input prep: zero extra HBM passes in the common (no-padding) case. ---
    if B_pad == B:
        x_p = x                                                   # pass-through
        y_p = labels.reshape(B, 1).astype(jnp.int32)
    else:
        x_p = jnp.zeros((B_pad, H), x.dtype).at[:B, :].set(x)
        y_p = jnp.zeros((B_pad, 1), jnp.int32).at[:B, 0].set(labels.astype(jnp.int32))

    if C == Cp and w.dtype == jnp.bfloat16:
        w_p = w                                                   # pass-through
    else:
        w_p = jnp.zeros((H, Cp), jnp.bfloat16).at[:, :C].set(w.astype(jnp.bfloat16))
    if C == Cp:
        b_p = b.reshape(1, C).astype(jnp.float32)
    else:
        b_p = jnp.zeros((1, Cp), jnp.float32).at[0, :C].set(b.astype(jnp.float32))

    kernel = _make_cls_kernel(C, Cp, B, B_pad, TB)

    logits_pad, nll_part = pl.pallas_call(
        kernel,
        out_shape=(
            jax.ShapeDtypeStruct((B_pad, Cp), out_dtype),
            jax.ShapeDtypeStruct((nb, 8, 128), jnp.float32),
        ),
        grid_spec=pltpu.PrefetchScalarGridSpec(
            num_scalar_prefetch=0,
            grid=(nb,),
            in_specs=[
                pl.BlockSpec((TB, H), lambda i: (i, 0)),    # x tile (pipelined)
                pl.BlockSpec((H, Cp), lambda i: (0, 0)),    # W resident
                pl.BlockSpec((1, Cp), lambda i: (0, 0)),    # bias resident
                pl.BlockSpec((TB, 1), lambda i: (i, 0)),    # labels tile
            ],
            out_specs=(
                pl.BlockSpec((TB, Cp), lambda i: (i, 0)),   # logits slab
                pl.BlockSpec((1, 8, 128), lambda i: (i, 0, 0)),  # per-tile NLL
            ),
        ),
        compiler_params=pltpu.CompilerParams(
            dimension_semantics=("parallel",),   # B tiles independent -> megacore
            vmem_limit_bytes=vmem_limit,
        ),
    )(x_p, w_p, b_p, y_p)

    logits = logits_pad
    if B_pad != B:
        logits = logits[:B]
    if Cp != C:
        logits = logits[:, :C]
    loss = jnp.sum(nll_part[:, 0, 0]) / jnp.float32(B)
    return {"logits": logits, "loss": loss}


def _reference_forward(x, w, b, labels, *, bf16_matmul=True):
    """Pure-JAX reference with the same precision choice as the kernel."""
    if bf16_matmul:
        logits = jnp.dot(x.astype(jnp.bfloat16), w.astype(jnp.bfloat16),
                         preferred_element_type=jnp.float32) + b[None, :].astype(jnp.float32)
    else:
        logits = x @ w + b[None, :]
    logp = jax.nn.log_softmax(logits, axis=-1)
    nll = -jnp.take_along_axis(logp, labels[:, None], axis=-1)[:, 0]
    return {"logits": logits.astype(x.dtype), "loss": jnp.mean(nll)}


if __name__ == "__main__":
    # Small, deterministic shapes: batch=8, hidden=128, num_classes=8.
    B, H, C = 8, 128, 8
    key = jax.random.PRNGKey(0)
    kx, kw, kb, ky = jax.random.split(key, 4)

    x = jax.random.normal(kx, (B, H), dtype=jnp.float32)
    # Deterministic parameter init (synthetic; not loaded from a checkpoint).
    w = jax.random.normal(kw, (H, C), dtype=jnp.float32) * (1.0 / jnp.sqrt(H))
    bias = jax.random.normal(kb, (C,), dtype=jnp.float32) * 0.01
    labels = jax.random.randint(ky, (B,), 0, C, dtype=jnp.int32)

    out = classification_forward(x, w, bias, labels)
    jax.block_until_ready(out["loss"])
    jax.block_until_ready(out["logits"])

    # Tight check vs. a precision-matched (bf16 matmul, f32 accum) reference.
    ref = _reference_forward(x, w, bias, labels, bf16_matmul=True)
    assert out["logits"].shape == (B, C)
    assert jnp.allclose(out["logits"].astype(jnp.float32),
                        ref["logits"].astype(jnp.float32), atol=1e-3, rtol=1e-3)
    assert jnp.allclose(out["loss"], ref["loss"], atol=1e-3, rtol=1e-3)

    # Loose semantic check vs. the full-f32 reference (bf16 matmul tolerance).
    ref32 = _reference_forward(x, w, bias, labels, bf16_matmul=False)
    assert jnp.allclose(out["logits"].astype(jnp.float32),
                        ref32["logits"].astype(jnp.float32), atol=5e-2, rtol=5e-2)
    assert jnp.allclose(out["loss"], ref32["loss"], atol=5e-2, rtol=5e-2)

    print("KERNEL_OK")
</pallas_src>

<mosaic_0001>
module attributes {stable_mosaic.version = 11 : i64} {
  func.func @kernel(%arg0: i32, %arg1: memref<8x128xf32, #tpu.memory_space<vmem>>, %arg2: memref<128x128xbf16, #tpu.memory_space<vmem>>, %arg3: memref<1x128xf32, #tpu.memory_space<vmem>>, %arg4: memref<8x1xi32, #tpu.memory_space<vmem>>, %arg5: memref<8x128xf32, #tpu.memory_space<vmem>>, %arg6: memref<1x8x128xf32, #tpu.memory_space<vmem>>) attributes {dimension_semantics = [#tpu.dimension_semantics<parallel>], iteration_bounds = array<i64: 1>, scalar_prefetch = 0 : i64, scratch_operands = 0 : i64, tpu.core_type = #tpu.core_type<tc>, window_params = [{transform_indices = @transform_0, window_bounds = array<i64: 8, 128>}, {pipeline_mode = #tpu.pipeline_mode<synchronous>, transform_indices = @transform_1, window_bounds = array<i64: 128, 128>}, {pipeline_mode = #tpu.pipeline_mode<synchronous>, transform_indices = @transform_2, window_bounds = array<i64: 1, 128>}, {transform_indices = @transform_3, window_bounds = array<i64: 8, 1>}, {transform_indices = @transform_4, window_bounds = array<i64: 8, 128>}, {transform_indices = @transform_5, window_bounds = array<i64: 1, 8, 128>}]} {
    %c0 = arith.constant 0 : index
    %c0_0 = arith.constant 0 : index
    %0 = vector.load %arg1[%c0, %c0_0] : memref<8x128xf32, #tpu.memory_space<vmem>>, vector<8x128xf32>
    %1 = arith.truncf %0 : vector<8x128xf32> to vector<8x128xbf16>
    %c0_1 = arith.constant 0 : index
    %c0_2 = arith.constant 0 : index
    %2 = vector.load %arg2[%c0_1, %c0_2] : memref<128x128xbf16, #tpu.memory_space<vmem>>, vector<128x128xbf16>
    %c0_3 = arith.constant 0 : index
    %c0_4 = arith.constant 0 : index
    %3 = vector.load %arg3[%c0_3, %c0_4] : memref<1x128xf32, #tpu.memory_space<vmem>>, vector<1x128xf32>
    %cst = arith.constant dense<0.000000e+00> : vector<8x128xf32>
    %4 = tpu.matmul %1, %2, %cst {dimension_numbers = #tpu.dot_dimension_numbers<[1], [0], [0], [1], [0, 0, 1, 1], [], []>} : vector<8x128xbf16>, vector<128x128xbf16>, vector<8x128xf32> -> vector<8x128xf32>
    %5 = vector.broadcast %3 : vector<1x128xf32> to vector<8x128xf32>
    %6 = arith.addf %4, %5 : vector<8x128xf32>
    %c0_5 = arith.constant 0 : index
    %c0_6 = arith.constant 0 : index
    %7 = vector.load %arg5[%c0_5, %c0_6] : memref<8x128xf32, #tpu.memory_space<vmem>>, vector<8x128xf32>
    tpu.vector_store %arg5[%c0_5, %c0_6], %6 {strides = array<i32>} : memref<8x128xf32, #tpu.memory_space<vmem>>, vector<8x128xf32>,
    %8 = tpu.iota {dimensions = array<i32: 1>} : vector<8x128xi32>
    %c8_i32 = arith.constant 8 : i32
    %9 = vector.broadcast %c8_i32 : i32 to vector<8x128xi32>
    %10 = arith.cmpi slt, %8, %9 : vector<8x128xi32>
    %cst_7 = arith.constant -1.000000e+30 : f32
    %11 = vector.broadcast %cst_7 : f32 to vector<8x128xf32>
    %12 = arith.select %10, %6, %11 : vector<8x128xi1>, vector<8x128xf32>
    %cst_8 = arith.constant dense<0xFF800000> : vector<8xf32>
    %13 = vector.multi_reduction <maximumf>, %12, %cst_8 [1] : vector<8x128xf32> to vector<8xf32>
    %14 = vector.shape_cast %13 : vector<8xf32> to vector<8x1xf32>
    %15 = vector.broadcast %14 : vector<8x1xf32> to vector<8x128xf32>
    %16 = arith.subf %12, %15 : vector<8x128xf32>
    %17 = math.exp %16 : vector<8x128xf32>
    %cst_9 = arith.constant dense<0.000000e+00> : vector<8xf32>
    %18 = vector.multi_reduction <add>, %17, %cst_9 [1] : vector<8x128xf32> to vector<8xf32>
    %19 = vector.shape_cast %18 : vector<8xf32> to vector<8x1xf32>
    %20 = math.log %19 : vector<8x1xf32>
    %c0_10 = arith.constant 0 : index
    %c0_11 = arith.constant 0 : index
    %21 = vector.load %arg4[%c0_10, %c0_11] : memref<8x1xi32, #tpu.memory_space<vmem>>, vector<8x1xi32>
    %22 = vector.broadcast %21 : vector<8x1xi32> to vector<8x128xi32>
    %23 = arith.cmpi eq, %8, %22 : vector<8x128xi32>
    %cst_12 = arith.constant 0.000000e+00 : f32
    %24 = vector.broadcast %cst_12 : f32 to vector<8x128xf32>
    %25 = arith.select %23, %16, %24 : vector<8x128xi1>, vector<8x128xf32>
    %cst_13 = arith.constant dense<0.000000e+00> : vector<8xf32>
    %26 = vector.multi_reduction <add>, %25, %cst_13 [1] : vector<8x128xf32> to vector<8xf32>
    %27 = vector.shape_cast %26 : vector<8xf32> to vector<8x1xf32>
    %28 = arith.subf %20, %27 : vector<8x1xf32>
    %29 = vector.shape_cast %28 : vector<8x1xf32> to vector<1x8x1xf32>
    %cst_14 = arith.constant dense<0.000000e+00> : vector<1xf32>
    %30 = vector.multi_reduction <add>, %29, %cst_14 [1, 2] : vector<1x8x1xf32> to vector<1xf32>
    %31 = vector.shape_cast %30 : vector<1xf32> to vector<1x1x1xf32>
    %32 = vector.extract %31[0, 0, 0] : f32 from vector<1x1x1xf32>
    %33 = vector.broadcast %32 : f32 to vector<1x8x128xf32>
    %c0_15 = arith.constant 0 : index
    %c0_16 = arith.constant 0 : index
    %c0_17 = arith.constant 0 : index
    %34 = vector.load %arg6[%c0_15, %c0_16, %c0_17] : memref<1x8x128xf32, #tpu.memory_space<vmem>>, vector<1x8x128xf32>
    tpu.vector_store %arg6[%c0_15, %c0_16, %c0_17], %33 {strides = array<i32>} : memref<1x8x128xf32, #tpu.memory_space<vmem>>, vector<1x8x128xf32>,
    return
  }
  func.func @transform_0(%arg0: i32) -> (i32, i32) {
    %c0_i32 = arith.constant 0 : i32
    %c0_i32_0 = arith.constant 0 : i32
    return %arg0, %c0_i32 : i32, i32
  }
  func.func @transform_1(%arg0: i32) -> (i32, i32) {
    %c0_i32 = arith.constant 0 : i32
    %c0_i32_0 = arith.constant 0 : i32
    %c0_i32_1 = arith.constant 0 : i32
    return %c0_i32, %c0_i32_0 : i32, i32
  }
  func.func @transform_2(%arg0: i32) -> (i32, i32) {
    %c0_i32 = arith.constant 0 : i32
    %c0_i32_0 = arith.constant 0 : i32
    %c0_i32_1 = arith.constant 0 : i32
    return %c0_i32, %c0_i32_0 : i32, i32
  }
  func.func @transform_3(%arg0: i32) -> (i32, i32) {
    %c0_i32 = arith.constant 0 : i32
    %c0_i32_0 = arith.constant 0 : i32
    return %arg0, %c0_i32 : i32, i32
  }
  func.func @transform_4(%arg0: i32) -> (i32, i32) {
    %c0_i32 = arith.constant 0 : i32
    %c0_i32_0 = arith.constant 0 : i32
    return %arg0, %c0_i32 : i32, i32
  }
  func.func @transform_5(%arg0: i32) -> (i32, i32, i32) {
    %c0_i32 = arith.constant 0 : i32
    %c0_i32_0 = arith.constant 0 : i32
    %c0_i32_1 = arith.constant 0 : i32
    return %arg0, %c0_i32, %c0_i32_0 : i32, i32, i32
  }
}

</mosaic_0001>

<llo_original>
// kernel: classification_forward.1
$region0: #{classification_forward.1}
  #allocation0 [shape = 'u32[]', space=smem, size = 0x4, offset = 0x4, fixed_abs, tag = 'smem constant byte address 0x4 - core index']
  #allocation1 [shape = 'u32[144,128]{1,0:T(1,128)}', space=vmem, size = 0x12000, scoped, tag = 'internal scratch']
  %s0 = inlined_call_operand.vmem [shape: f32[8,128], index: 0, kind: input, shape index: {}]
  %s1 = inlined_call_operand.vmem [shape: bf16[128,128], index: 1, kind: input, shape index: {}]
  %s2 = inlined_call_operand.vmem [shape: f32[1,128], index: 2, kind: input, shape index: {}]
  %s3 = inlined_call_operand.vmem [shape: s32[8,1], index: 3, kind: input, shape index: {}]
  %s4 = inlined_call_operand.hbm [shape: f32[8,128], index: 4, kind: output, shape index: {0}]
  %s5 = inlined_call_operand.vmem [shape: f32[1,8,128], index: 5, kind: output, shape index: {1}]
  %6 = xla_tuple %s4, %s5
  %s7 = sld [smem:[#allocation0]]
  $region34: #{classification_forward.1} parent=0
    _
  %s9 = ssub.s32 1, %s7
  %s10 = scalar_select 0, %s9, %s7
  $region1: #{classification_forward.1} parent=0
    #allocation2 [shape = 'u8[4096]{0}', space=vmem, size = 0x1000, scoped, tag = 'output window, operand 0, single buffered']
    #allocation3 [shape = 's32[1]{0}', space=sflag, size = 0x4, scoped, tag = 'scoped memory for classification_forward.1']
    %11 = vsyncpa [#allocation3], 0
    // Predicated region
    $region2: #{classification_forward.1} parent=1 // pred_check
      _
    $region3: #{classification_forward.1} parent=1 // pred_check_branch
      %13 = sbr.rel (0) target = $region5
    $region4: #{classification_forward.1} parent=1 // pred_region
      _
    $region5: #{classification_forward.1} parent=1 // pred_fallthru
      _
    // Predicated region
    $region6: #{classification_forward.1} parent=1 // pred_check
      _
    $region7: #{classification_forward.1} parent=1 // pred_check_branch
      %15 = sbr.rel (0) target = $region9
    $region8: #{classification_forward.1} parent=1 // pred_region
      _
    $region9: #{classification_forward.1} parent=1 // pred_fallthru
      _
    // Predicated region
    $region10: #{classification_forward.1} parent=1 // pred_check
      _
    $region11: #{classification_forward.1} parent=1 // pred_check_branch
      %17 = sbr.rel (0) target = $region13
    $region12: #{classification_forward.1} parent=1 // pred_region
      _
    $region13: #{classification_forward.1} parent=1 // pred_fallthru
      _
    // Predicated region
    $region14: #{classification_forward.1} parent=1 // pred_check
      _
    $region15: #{classification_forward.1} parent=1 // pred_check_branch
      %19 = sbr.rel (0) target = $region17
    $region16: #{classification_forward.1} parent=1 // pred_region
      _
    $region17: #{classification_forward.1} parent=1 // pred_fallthru
      _
    %v21 = vld [vmem:[%s0] sm:$0xff]
    %v22 = vpack.c.bf16 %v21, %v21
    %v23 = vld [vmem:[%s1] sm:$0xf]
    %v24 = vld [vmem:[%s1 + $0x4] sm:$0xf]
    %v25 = vld [vmem:[%s1 + $0x8] sm:$0xf]
    %v26 = vld [vmem:[%s1 + $0xc] sm:$0xf]
    %v27 = vld [vmem:[%s1 + $0x10] sm:$0xf]
    %v28 = vld [vmem:[%s1 + $0x14] sm:$0xf]
    %v29 = vld [vmem:[%s1 + $0x18] sm:$0xf]
    %v30 = vld [vmem:[%s1 + $0x1c] sm:$0xf]
    %v31 = vld [vmem:[%s1 + $0x20] sm:$0xf]
    %v32 = vld [vmem:[%s1 + $0x24] sm:$0xf]
    %v33 = vld [vmem:[%s1 + $0x28] sm:$0xf]
    %v34 = vld [vmem:[%s1 + $0x2c] sm:$0xf]
    %v35 = vld [vmem:[%s1 + $0x30] sm:$0xf]
    %v36 = vld [vmem:[%s1 + $0x34] sm:$0xf]
    %v37 = vld [vmem:[%s1 + $0x38] sm:$0xf]
    %v38 = vld [vmem:[%s1 + $0x3c] sm:$0xf]
    %v39 = vld [vmem:[%s2] sm:$0x1]
    %v41 = vlaneseq
    %v42 = vshrl.u32 %v41, 7
    %v43 = vsub.s32 0, %v42
    %v44 = vrot.slane %v39, %v43
    %v62 = vunpack.c.l.b16 %v23
    %v63 = vunpack.c.l.b16 %v24
    %v64 = vunpack.c.l.b16 %v25
    %v65 = vunpack.c.l.b16 %v26
    %v66 = vunpack.c.l.b16 %v27
    %v67 = vunpack.c.l.b16 %v28
    %v68 = vunpack.c.l.b16 %v29
    %v69 = vunpack.c.l.b16 %v30
    %v70 = vunpack.c.l.b16 %v31
    %v71 = vunpack.c.l.b16 %v32
    %v72 = vunpack.c.l.b16 %v33
    %v73 = vunpack.c.l.b16 %v34
    %v74 = vunpack.c.l.b16 %v35
    %v75 = vunpack.c.l.b16 %v36
    %v76 = vunpack.c.l.b16 %v37
    %v77 = vunpack.c.l.b16 %v38
    %v78 = vpack.c.b16 %v63, %v62
    %v79 = vpack.c.b16 %v65, %v64
    %v80 = vpack.c.b16 %v67, %v66
    %v81 = vpack.c.b16 %v69, %v68
    %v82 = vpack.c.b16 %v71, %v70
    %v83 = vpack.c.b16 %v73, %v72
    %v84 = vpack.c.b16 %v75, %v74
    %v85 = vpack.c.b16 %v77, %v76
    %94 = vmatprep.subr.bf16.mxu0 0
    %95 = vmatpush1.bf16.msra.mxu0 %v78
    %96 = vmatprep.subr.bf16.mxu0 0
    %97 = vmatpush1.bf16.msra.mxu0 %v79
    %98 = vmatprep.subr.bf16.mxu0 0
    %99 = vmatpush1.bf16.msra.mxu0 %v80
    %100 = vmatprep.subr.bf16.mxu0 0
    %101 = vmatpush1.bf16.msra.mxu0 %v81
    %102 = vmatprep.subr.bf16.mxu0 0
    %103 = vmatpush1.bf16.msra.mxu0 %v82
    %104 = vmatprep.subr.bf16.mxu0 0
    %105 = vmatpush1.bf16.msra.mxu0 %v83
    %106 = vmatprep.subr.bf16.mxu0 0
    %107 = vmatpush1.bf16.msra.mxu0 %v84
    %108 = vmatprep.subr.bf16.mxu0 0
    %109 = vmatpush1.bf16.msra.mxu0 %v85
    %110 = vmatprep.subr.bf16.mxu0 0
    %111 = vmatpush1.bf16.msra.mxu0 0
    %112 = vmatprep.subr.bf16.mxu0 0
    %113 = vmatpush1.bf16.msra.mxu0 0
    %114 = vmatprep.subr.bf16.mxu0 0
    %115 = vmatpush1.bf16.msra.mxu0 0
    %116 = vmatprep.subr.bf16.mxu0 0
    %117 = vmatpush1.bf16.msra.mxu0 0
    %118 = vmatprep.subr.bf16.mxu0 0
    %119 = vmatpush1.bf16.msra.mxu0 0
    %120 = vmatprep.subr.bf16.mxu0 0
    %121 = vmatpush1.bf16.msra.mxu0 0
    %122 = vmatprep.subr.bf16.mxu0 0
    %123 = vmatpush1.bf16.msra.mxu0 0
    %124 = vmatprep.subr.bf16.mxu0 0
    %125 = vmatpush1.bf16.msra.mxu0 0
    %126 = vmatprep.mubr.bf16.mxu0 0
    %127 = vmatmul.mubr.bf16.gmra.mrb[0].mxu0 %v22
    %v128 = vpop.f32.mrb[0].mxu0
    %v129 = vadd.f32 %v44, %v128
    %v130 = vpop.f32.mrb[0].mxu0
    %v131 = vpop.f32.mrb[0].mxu0
    %v132 = vpop.f32.mrb[0].mxu0
    %133 = vdwg.mxu0
    %134 = vst [vmem:[#allocation2] sm:$0xff] %v129
    %v135 = vlaneseq
    %v136 = vand.u32 %v135, 127
    %vm137 = vcmp.lt.s32.totalorder %v136, 8
    %v138 = vsel %vm137, %v129, -1e+30
    %139 = vmax.xlane.f32.xlu0 %v138
    %v140 = vpop.xlane.xlu0 %139
    %v141 = vsub.f32 %v138, %v140
    %v142 = vmul.f32 %v141, 1.442695
    %v143 = vpow.pop %v142
    %144 = vadd.xlane.f32.xlu0 %v143
    %v145 = vpop.xlane.xlu0 %144
    %v146 = vlog2.pop %v145
    %v147 = vmul.f32 %v146, 0.6931472
    %v148 = vld [vmem:[%s3] sm:$0xff]
    %149 = vset.pattern.permute.xlu0 0
    %150 = vperm.xlu0 %149, %v148
    %v151 = vpop.permute.xlu0 %150
    %vm152 = vcmp.eq.s32.totalorder %v136, %v151
    %v153 = vsel %vm152, %v141, 0.0
    %154 = vadd.xlane.f32.xlu0 %v153
    %v155 = vpop.xlane.xlu0 %154
    %v156 = vsub.f32 %v147, %v155
    %vm157 = vcmask 7168
    %v158 = vsel %vm157, %v156, 0.0
    %159 = vadd.xlane.f32.xlu0 %v158
    %v160 = vpop.xlane.xlu0 %159
    %v161 = vrot.slane %v160, 4
    %v162 = vadd.f32 %v160, %v161
    %v163 = vrot.slane %v162, 2
    %v164 = vadd.f32 %v162, %v163
    %v165 = vrot.slane %v164, 1
    %v166 = vadd.f32 %v164, %v165
    %s167 = vtos %v166
    %v168 = vstv %s167
    %169 = vst [vmem:[%s5] sm:$0xff] %v168
    // Predicated region
    $region18: #{classification_forward.1} parent=1 // pred_check
      _
    $region19: #{classification_forward.1} parent=1 // pred_check_branch
      %171 = sbr.rel (0) target = $region21
    $region20: #{classification_forward.1} parent=1 // pred_region
      %s173 = ssub.s32 128, 128
      %174 = vsyncadd [#allocation3], %s173
      %s176 = sshll.u32 [#allocation2], 4
      %s177 = int_to_ptr.vmem [resolvable:$true] %s176
      %179 = dma.vmem_to_hbm [thread:$0]  %s177, 128, %s4, [#allocation3]
    $region21: #{classification_forward.1} parent=1 // pred_fallthru
      _
    // Predicated region
    $region22: #{classification_forward.1} parent=1 // pred_check
      _
    $region23: #{classification_forward.1} parent=1 // pred_check_branch
      %181 = sbr.rel (0) target = $region25
    $region24: #{classification_forward.1} parent=1 // pred_region
      _
    $region25: #{classification_forward.1} parent=1 // pred_fallthru
      _
    // Predicated region
    $region26: #{classification_forward.1} parent=1 // pred_check
      _
    $region27: #{classification_forward.1} parent=1 // pred_check_branch
      %183 = sbr.rel (0) target = $region29
    $region28: #{classification_forward.1} parent=1 // pred_region
      %184 = dma.done [#allocation3], 128
    $region29: #{classification_forward.1} parent=1 // pred_fallthru
      _
    // Predicated region
    $region30: #{classification_forward.1} parent=1 // pred_check
      _
    $region31: #{classification_forward.1} parent=1 // pred_check_branch
      %186 = sbr.rel (0) target = $region33
    $region32: #{classification_forward.1} parent=1 // pred_region
      _
    $region33: #{classification_forward.1} parent=1 // pred_fallthru
      _
    %187 = vsyncpa [#allocation3], 1

</llo_original>
